<compile_context>
chip_gen: v5e
topology: v5e:2x2
jax: 0.10.0
libtpu: 0.0.40
codegen_flags: <defaults>
</compile_context>

<pallas_src>
import jax
import jax.numpy as jnp
import numpy as np
from jax.experimental import pallas as pl
from jax.experimental.pallas import tpu as pltpu


def _round_up(v, m):
    return (v + m - 1) // m * m


def _vmem_capacity_bytes():
    """Physical VMEM of the local TPU generation (conservative fallback)."""
    try:
        info = pltpu.get_tpu_info()
        for name in ("vmem_capacity_bytes", "vmem_bytes", "vmem_size_bytes"):
            cap = getattr(info, name, None)
            if cap:
                return int(cap)
    except Exception:
        pass
    return 64 * 1024 * 1024  # v7x-sized fallback; safe on every generation


def _make_gs_kernel(n_rows, *, static_outer, inner_unroll=8):
    """Gram-Schmidt over the leading axis of a (n_rows, TILE_B, D) block.

    Every batch column b (one (model, channel) problem, living on sublanes) has
    its n_rows length-D vectors orthonormalized sequentially, exactly like the
    PyTorch loop: projection coefficients use the original vector v against the
    already-normalized basis rows.  Prior basis rows are kept in an f32 VMEM
    scratch (torch accumulates in f32); finished rows are written to o_ref.
    """

    def _finalize(w):
        ss = jnp.sum(w * w, axis=-1, keepdims=True)      # (TILE_B, 1)
        wn = w * jax.lax.rsqrt(ss)                        # exact rsqrt on EUP
        # torch: wnorm[torch.isnan(wnorm)] = 0  (zero-norm residual -> 0 row)
        return jnp.where(jnp.isnan(wn), jnp.zeros_like(wn), wn)

    if static_outer:
        def kernel(x_ref, o_ref, basis_ref):
            for i in range(n_rows):
                v = x_ref[i].astype(jnp.float32)          # (TILE_B, D)
                if i == 0:
                    w = v
                elif i <= inner_unroll:
                    w = v
                    for j in range(i):                     # small static unroll
                        b = basis_ref[j]
                        c = jnp.sum(v * b, axis=-1, keepdims=True)
                        w = w - c * b
                else:
                    def body(j, w_acc):
                        b = basis_ref[j]
                        c = jnp.sum(v * b, axis=-1, keepdims=True)
                        return w_acc - c * b
                    w = jax.lax.fori_loop(0, i, body, v)
                wn = _finalize(w)
                basis_ref[i] = wn
                o_ref[i] = wn.astype(o_ref.dtype)
    else:
        def kernel(x_ref, o_ref, basis_ref):
            def outer(i, carry):
                v = x_ref[i].astype(jnp.float32)

                def body(j, w_acc):
                    b = basis_ref[j]
                    c = jnp.sum(v * b, axis=-1, keepdims=True)
                    return w_acc - c * b

                w = jax.lax.fori_loop(0, i, body, v)
                wn = _finalize(w)
                basis_ref[i] = wn
                o_ref[i] = wn.astype(o_ref.dtype)
                return carry

            jax.lax.fori_loop(0, n_rows, outer, 0)

    return kernel


def orthogonal_layer_2d(x, *, tile_b_max=None):
    """Forward pass of OrthogonalLayer2D.

    x: [n_samples, n_models, n_channels, H, W] (any float dtype).
    Returns the same shape/dtype; for each (model, channel) pair the n_samples
    vectors of length H*W are orthonormalized sequentially (literal torch
    semantics, f32 accumulation internally).
    """
    assert x.ndim == 5, "OrthogonalLayer2D expects 5D input [S, M, C, H, W]"
    S, M, C, H, W = x.shape
    D = H * W
    B = M * C
    itemsize = jnp.dtype(x.dtype).itemsize

    xb = x.reshape(S, B, D)            # free contiguous reshape, native dtype

    Dp = _round_up(D, 128)             # physical lane footprint (estimate only)
    B8 = _round_up(B, 8)

    # ---- Per-generation VMEM budget -------------------------------------
    phys_vmem = _vmem_capacity_bytes()
    vmem_limit = min(64 * 1024 * 1024, (phys_vmem * 3) // 4)   # 64 MiB v5e/v6e, 48 MiB v7x
    block_budget = vmem_limit - 8 * 1024 * 1024                # compiler-scratch headroom

    # Conservative f32-equivalent footprint per batch column:
    # in x2 buffers + out x2 buffers + f32 basis scratch x1 (double buffered),
    # or 1+1+1 when single buffered.
    col_db = S * Dp * 4 * (2 + 2 + 1)
    col_sb = S * Dp * 4 * (1 + 1 + 1)

    buffer_count = 2
    tile_cap = (block_budget // col_db) // 8 * 8
    if tile_cap < 8:
        buffer_count = 1                               # fall back: no double buffering
        tile_cap = (block_budget // col_sb) // 8 * 8
        if tile_cap < 8:
            raise ValueError(
                f"OrthogonalLayer2D block (S={S}, D={D}) does not fit in "
                f"{vmem_limit // (1 << 20)} MiB of VMEM even at TILE_B=8 with "
                "single buffering; reduce n_samples or the spatial size.")

    TILE_B = min(int(tile_cap), B8)
    if B8 >= 16:
        # Keep >= 2 grid steps: lets the "parallel" axis shard across both
        # TensorCores on v7x and gives the pipeline something to overlap.
        TILE_B = min(TILE_B, max(8, (B8 // 2) // 8 * 8))
    if tile_b_max is not None:
        TILE_B = max(8, min(TILE_B, _round_up(int(tile_b_max), 8)))

    grid = (pl.cdiv(B, TILE_B),)

    spec_kwargs = {}
    if buffer_count == 1:
        spec_kwargs = dict(pipeline_mode=pl.Buffered(1))
    # Last block dim uses the full D extent, so D % 128 != 0 needs no padding
    # (compiler masks the tail lanes in the reductions).  TILE_B is a multiple
    # of 8; a ragged final B block reads garbage columns whose writes Pallas
    # discards (columns are independent, so valid results are untouched).
    in_spec = pl.BlockSpec((S, TILE_B, D), lambda b: (0, b, 0), **spec_kwargs)
    out_spec = pl.BlockSpec((S, TILE_B, D), lambda b: (0, b, 0), **spec_kwargs)

    kernel = _make_gs_kernel(S, static_outer=(S <= 16))

    cost = pl.CostEstimate(
        flops=int(B * D * (3 * S * (S - 1) // 2 + 3 * S)),
        transcendentals=int(B * S),
        bytes_accessed=int(S * B * D * 2 * itemsize),
    )

    out = pl.pallas_call(
        kernel,
        out_shape=jax.ShapeDtypeStruct((S, B, D), x.dtype),
        grid=grid,
        in_specs=[in_spec],
        out_specs=out_spec,
        scratch_shapes=[pltpu.VMEM((S, TILE_B, D), jnp.float32)],
        compiler_params=pltpu.CompilerParams(
            dimension_semantics=("parallel",),
            vmem_limit_bytes=int(vmem_limit),
        ),
        cost_estimate=cost,
    )(xb)

    # Note: input_output_aliases deliberately omitted -- without donation XLA
    # would insert a defensive copy of x, re-adding an HBM round trip.
    return out.reshape(S, M, C, H, W)


def _reference(x):
    """Pure-JAX replication of the literal torch forward (f32), for checks."""
    S, M, C, H, W = x.shape
    D = H * W
    xt = jnp.transpose(x.astype(jnp.float32).reshape(S, M, C, D), (1, 2, 0, 3))
    basis = []
    for i in range(S):
        v = xt[:, :, i, :]
        w = v
        for b in basis:
            c = jnp.sum(v * b, axis=-1, keepdims=True)
            w = w - c * b
        nrm = jnp.sqrt(jnp.sum(w * w, axis=-1, keepdims=True))
        wn = w / nrm
        wn = jnp.where(jnp.isnan(wn), jnp.zeros_like(wn), wn)
        basis.append(wn)
    out = jnp.stack(basis, axis=2)                              # [M, C, S, D]
    return jnp.transpose(out, (2, 0, 1, 3)).reshape(S, M, C, H, W)


if __name__ == "__main__":
    key = jax.random.PRNGKey(0)
    k1, k2 = jax.random.split(key)

    # Primary small shape: D = 16*16 = 256 (lane dense), B = 12 -> 2 grid steps.
    S, M, C, H, W = 4, 3, 4, 16, 16
    x1 = jax.random.normal(k1, (S, M, C, H, W), dtype=jnp.float32)
    y1 = jax.block_until_ready(orthogonal_layer_2d(x1))
    assert y1.shape == (S, M, C, H, W) and y1.dtype == x1.dtype
    np.testing.assert_allclose(np.asarray(y1), np.asarray(_reference(x1)),
                               rtol=1e-4, atol=1e-5)

    # Ragged shapes: D = 49 (not a multiple of 128), B = 6 (< 8) -- exercises
    # the unpadded full-extent D block and the partial B block paths.
    S2, M2, C2, H2, W2 = 3, 2, 3, 7, 7
    x2 = jax.random.normal(k2, (S2, M2, C2, H2, W2), dtype=jnp.float32)
    y2 = jax.block_until_ready(orthogonal_layer_2d(x2))
    np.testing.assert_allclose(np.asarray(y2), np.asarray(_reference(x2)),
                               rtol=1e-4, atol=1e-5)

    # Native bf16 in/out (basis kept in the f32 VMEM scratch inside the kernel).
    x3 = x1.astype(jnp.bfloat16)
    y3 = jax.block_until_ready(orthogonal_layer_2d(x3))
    assert y3.dtype == jnp.bfloat16
    np.testing.assert_allclose(np.asarray(y3.astype(jnp.float32)),
                               np.asarray(_reference(x3)),
                               rtol=2e-2, atol=1e-2)

    print("KERNEL_OK")
</pallas_src>

<mosaic_0001>
module attributes {stable_mosaic.version = 11 : i64} {
  func.func @kernel(%arg0: i32, %arg1: memref<4x8x256xf32, #tpu.memory_space<vmem>>, %arg2: memref<4x8x256xf32, #tpu.memory_space<vmem>>, %arg3: memref<4x8x256xf32, #tpu.memory_space<vmem>>) attributes {dimension_semantics = [#tpu.dimension_semantics<parallel>], iteration_bounds = array<i64: 2>, scalar_prefetch = 0 : i64, scratch_operands = 1 : i64, tpu.core_type = #tpu.core_type<tc>, window_params = [{transform_indices = @transform_0, window_bounds = array<i64: 4, 8, 256>}, {transform_indices = @transform_1, window_bounds = array<i64: 4, 8, 256>}]} {
    %c0 = arith.constant 0 : index
    %c0_0 = arith.constant 0 : index
    %c0_1 = arith.constant 0 : index
    %0 = vector.load %arg1[%c0, %c0_0, %c0_1] : memref<4x8x256xf32, #tpu.memory_space<vmem>>, vector<1x8x256xf32>
    %1 = vector.shape_cast %0 : vector<1x8x256xf32> to vector<8x256xf32>
    %2 = arith.mulf %1, %1 : vector<8x256xf32>
    %cst = arith.constant dense<0.000000e+00> : vector<8xf32>
    %3 = vector.multi_reduction <add>, %2, %cst [1] : vector<8x256xf32> to vector<8xf32>
    %4 = vector.shape_cast %3 : vector<8xf32> to vector<8x1xf32>
    %5 = math.rsqrt %4 : vector<8x1xf32>
    %6 = vector.broadcast %5 : vector<8x1xf32> to vector<8x256xf32>
    %7 = arith.mulf %1, %6 : vector<8x256xf32>
    %8 = arith.cmpf one, %7, %7 : vector<8x256xf32>
    %cst_2 = arith.constant 0.000000e+00 : f32
    %9 = vector.broadcast %cst_2 : f32 to vector<8x256xf32>
    %10 = arith.select %8, %9, %7 : vector<8x256xi1>, vector<8x256xf32>
    %c0_3 = arith.constant 0 : index
    %c0_4 = arith.constant 0 : index
    %c0_5 = arith.constant 0 : index
    %11 = vector.load %arg3[%c0_3, %c0_4, %c0_5] : memref<4x8x256xf32, #tpu.memory_space<vmem>>, vector<1x8x256xf32>
    %12 = vector.shape_cast %11 : vector<1x8x256xf32> to vector<8x256xf32>
    %13 = vector.shape_cast %10 : vector<8x256xf32> to vector<1x8x256xf32>
    tpu.vector_store %arg3[%c0_3, %c0_4, %c0_5], %13 {strides = array<i32>} : memref<4x8x256xf32, #tpu.memory_space<vmem>>, vector<1x8x256xf32>,
    %c0_6 = arith.constant 0 : index
    %c0_7 = arith.constant 0 : index
    %c0_8 = arith.constant 0 : index
    %14 = vector.load %arg2[%c0_6, %c0_7, %c0_8] : memref<4x8x256xf32, #tpu.memory_space<vmem>>, vector<1x8x256xf32>
    %15 = vector.shape_cast %14 : vector<1x8x256xf32> to vector<8x256xf32>
    %16 = vector.shape_cast %10 : vector<8x256xf32> to vector<1x8x256xf32>
    tpu.vector_store %arg2[%c0_6, %c0_7, %c0_8], %16 {strides = array<i32>} : memref<4x8x256xf32, #tpu.memory_space<vmem>>, vector<1x8x256xf32>,
    %c1 = arith.constant 1 : index
    %c0_9 = arith.constant 0 : index
    %c0_10 = arith.constant 0 : index
    %17 = vector.load %arg1[%c1, %c0_9, %c0_10] : memref<4x8x256xf32, #tpu.memory_space<vmem>>, vector<1x8x256xf32>
    %18 = vector.shape_cast %17 : vector<1x8x256xf32> to vector<8x256xf32>
    %c0_11 = arith.constant 0 : index
    %c0_12 = arith.constant 0 : index
    %c0_13 = arith.constant 0 : index
    %19 = vector.load %arg3[%c0_11, %c0_12, %c0_13] : memref<4x8x256xf32, #tpu.memory_space<vmem>>, vector<1x8x256xf32>
    %20 = vector.shape_cast %19 : vector<1x8x256xf32> to vector<8x256xf32>
    %21 = arith.mulf %18, %20 : vector<8x256xf32>
    %cst_14 = arith.constant dense<0.000000e+00> : vector<8xf32>
    %22 = vector.multi_reduction <add>, %21, %cst_14 [1] : vector<8x256xf32> to vector<8xf32>
    %23 = vector.shape_cast %22 : vector<8xf32> to vector<8x1xf32>
    %24 = vector.broadcast %23 : vector<8x1xf32> to vector<8x256xf32>
    %25 = arith.mulf %24, %20 : vector<8x256xf32>
    %26 = arith.subf %18, %25 : vector<8x256xf32>
    %27 = arith.mulf %26, %26 : vector<8x256xf32>
    %cst_15 = arith.constant dense<0.000000e+00> : vector<8xf32>
    %28 = vector.multi_reduction <add>, %27, %cst_15 [1] : vector<8x256xf32> to vector<8xf32>
    %29 = vector.shape_cast %28 : vector<8xf32> to vector<8x1xf32>
    %30 = math.rsqrt %29 : vector<8x1xf32>
    %31 = vector.broadcast %30 : vector<8x1xf32> to vector<8x256xf32>
    %32 = arith.mulf %26, %31 : vector<8x256xf32>
    %33 = arith.cmpf one, %32, %32 : vector<8x256xf32>
    %cst_16 = arith.constant 0.000000e+00 : f32
    %34 = vector.broadcast %cst_16 : f32 to vector<8x256xf32>
    %35 = arith.select %33, %34, %32 : vector<8x256xi1>, vector<8x256xf32>
    %c1_17 = arith.constant 1 : index
    %c0_18 = arith.constant 0 : index
    %c0_19 = arith.constant 0 : index
    %36 = vector.load %arg3[%c1_17, %c0_18, %c0_19] : memref<4x8x256xf32, #tpu.memory_space<vmem>>, vector<1x8x256xf32>
    %37 = vector.shape_cast %36 : vector<1x8x256xf32> to vector<8x256xf32>
    %38 = vector.shape_cast %35 : vector<8x256xf32> to vector<1x8x256xf32>
    tpu.vector_store %arg3[%c1_17, %c0_18, %c0_19], %38 {strides = array<i32>} : memref<4x8x256xf32, #tpu.memory_space<vmem>>, vector<1x8x256xf32>,
    %c1_20 = arith.constant 1 : index
    %c0_21 = arith.constant 0 : index
    %c0_22 = arith.constant 0 : index
    %39 = vector.load %arg2[%c1_20, %c0_21, %c0_22] : memref<4x8x256xf32, #tpu.memory_space<vmem>>, vector<1x8x256xf32>
    %40 = vector.shape_cast %39 : vector<1x8x256xf32> to vector<8x256xf32>
    %41 = vector.shape_cast %35 : vector<8x256xf32> to vector<1x8x256xf32>
    tpu.vector_store %arg2[%c1_20, %c0_21, %c0_22], %41 {strides = array<i32>} : memref<4x8x256xf32, #tpu.memory_space<vmem>>, vector<1x8x256xf32>,
    %c2 = arith.constant 2 : index
    %c0_23 = arith.constant 0 : index
    %c0_24 = arith.constant 0 : index
    %42 = vector.load %arg1[%c2, %c0_23, %c0_24] : memref<4x8x256xf32, #tpu.memory_space<vmem>>, vector<1x8x256xf32>
    %43 = vector.shape_cast %42 : vector<1x8x256xf32> to vector<8x256xf32>
    %c0_25 = arith.constant 0 : index
    %c0_26 = arith.constant 0 : index
    %c0_27 = arith.constant 0 : index
    %44 = vector.load %arg3[%c0_25, %c0_26, %c0_27] : memref<4x8x256xf32, #tpu.memory_space<vmem>>, vector<1x8x256xf32>
    %45 = vector.shape_cast %44 : vector<1x8x256xf32> to vector<8x256xf32>
    %46 = arith.mulf %43, %45 : vector<8x256xf32>
    %cst_28 = arith.constant dense<0.000000e+00> : vector<8xf32>
    %47 = vector.multi_reduction <add>, %46, %cst_28 [1] : vector<8x256xf32> to vector<8xf32>
    %48 = vector.shape_cast %47 : vector<8xf32> to vector<8x1xf32>
    %49 = vector.broadcast %48 : vector<8x1xf32> to vector<8x256xf32>
    %50 = arith.mulf %49, %45 : vector<8x256xf32>
    %51 = arith.subf %43, %50 : vector<8x256xf32>
    %c1_29 = arith.constant 1 : index
    %c0_30 = arith.constant 0 : index
    %c0_31 = arith.constant 0 : index
    %52 = vector.load %arg3[%c1_29, %c0_30, %c0_31] : memref<4x8x256xf32, #tpu.memory_space<vmem>>, vector<1x8x256xf32>
    %53 = vector.shape_cast %52 : vector<1x8x256xf32> to vector<8x256xf32>
    %54 = arith.mulf %43, %53 : vector<8x256xf32>
    %cst_32 = arith.constant dense<0.000000e+00> : vector<8xf32>
    %55 = vector.multi_reduction <add>, %54, %cst_32 [1] : vector<8x256xf32> to vector<8xf32>
    %56 = vector.shape_cast %55 : vector<8xf32> to vector<8x1xf32>
    %57 = vector.broadcast %56 : vector<8x1xf32> to vector<8x256xf32>
    %58 = arith.mulf %57, %53 : vector<8x256xf32>
    %59 = arith.subf %51, %58 : vector<8x256xf32>
    %60 = arith.mulf %59, %59 : vector<8x256xf32>
    %cst_33 = arith.constant dense<0.000000e+00> : vector<8xf32>
    %61 = vector.multi_reduction <add>, %60, %cst_33 [1] : vector<8x256xf32> to vector<8xf32>
    %62 = vector.shape_cast %61 : vector<8xf32> to vector<8x1xf32>
    %63 = math.rsqrt %62 : vector<8x1xf32>
    %64 = vector.broadcast %63 : vector<8x1xf32> to vector<8x256xf32>
    %65 = arith.mulf %59, %64 : vector<8x256xf32>
    %66 = arith.cmpf one, %65, %65 : vector<8x256xf32>
    %cst_34 = arith.constant 0.000000e+00 : f32
    %67 = vector.broadcast %cst_34 : f32 to vector<8x256xf32>
    %68 = arith.select %66, %67, %65 : vector<8x256xi1>, vector<8x256xf32>
    %c2_35 = arith.constant 2 : index
    %c0_36 = arith.constant 0 : index
    %c0_37 = arith.constant 0 : index
    %69 = vector.load %arg3[%c2_35, %c0_36, %c0_37] : memref<4x8x256xf32, #tpu.memory_space<vmem>>, vector<1x8x256xf32>
    %70 = vector.shape_cast %69 : vector<1x8x256xf32> to vector<8x256xf32>
    %71 = vector.shape_cast %68 : vector<8x256xf32> to vector<1x8x256xf32>
    tpu.vector_store %arg3[%c2_35, %c0_36, %c0_37], %71 {strides = array<i32>} : memref<4x8x256xf32, #tpu.memory_space<vmem>>, vector<1x8x256xf32>,
    %c2_38 = arith.constant 2 : index
    %c0_39 = arith.constant 0 : index
    %c0_40 = arith.constant 0 : index
    %72 = vector.load %arg2[%c2_38, %c0_39, %c0_40] : memref<4x8x256xf32, #tpu.memory_space<vmem>>, vector<1x8x256xf32>
    %73 = vector.shape_cast %72 : vector<1x8x256xf32> to vector<8x256xf32>
    %74 = vector.shape_cast %68 : vector<8x256xf32> to vector<1x8x256xf32>
    tpu.vector_store %arg2[%c2_38, %c0_39, %c0_40], %74 {strides = array<i32>} : memref<4x8x256xf32, #tpu.memory_space<vmem>>, vector<1x8x256xf32>,
    %c3 = arith.constant 3 : index
    %c0_41 = arith.constant 0 : index
    %c0_42 = arith.constant 0 : index
    %75 = vector.load %arg1[%c3, %c0_41, %c0_42] : memref<4x8x256xf32, #tpu.memory_space<vmem>>, vector<1x8x256xf32>
    %76 = vector.shape_cast %75 : vector<1x8x256xf32> to vector<8x256xf32>
    %c0_43 = arith.constant 0 : index
    %c0_44 = arith.constant 0 : index
    %c0_45 = arith.constant 0 : index
    %77 = vector.load %arg3[%c0_43, %c0_44, %c0_45] : memref<4x8x256xf32, #tpu.memory_space<vmem>>, vector<1x8x256xf32>
    %78 = vector.shape_cast %77 : vector<1x8x256xf32> to vector<8x256xf32>
    %79 = arith.mulf %76, %78 : vector<8x256xf32>
    %cst_46 = arith.constant dense<0.000000e+00> : vector<8xf32>
    %80 = vector.multi_reduction <add>, %79, %cst_46 [1] : vector<8x256xf32> to vector<8xf32>
    %81 = vector.shape_cast %80 : vector<8xf32> to vector<8x1xf32>
    %82 = vector.broadcast %81 : vector<8x1xf32> to vector<8x256xf32>
    %83 = arith.mulf %82, %78 : vector<8x256xf32>
    %84 = arith.subf %76, %83 : vector<8x256xf32>
    %c1_47 = arith.constant 1 : index
    %c0_48 = arith.constant 0 : index
    %c0_49 = arith.constant 0 : index
    %85 = vector.load %arg3[%c1_47, %c0_48, %c0_49] : memref<4x8x256xf32, #tpu.memory_space<vmem>>, vector<1x8x256xf32>
    %86 = vector.shape_cast %85 : vector<1x8x256xf32> to vector<8x256xf32>
    %87 = arith.mulf %76, %86 : vector<8x256xf32>
    %cst_50 = arith.constant dense<0.000000e+00> : vector<8xf32>
    %88 = vector.multi_reduction <add>, %87, %cst_50 [1] : vector<8x256xf32> to vector<8xf32>
    %89 = vector.shape_cast %88 : vector<8xf32> to vector<8x1xf32>
    %90 = vector.broadcast %89 : vector<8x1xf32> to vector<8x256xf32>
    %91 = arith.mulf %90, %86 : vector<8x256xf32>
    %92 = arith.subf %84, %91 : vector<8x256xf32>
    %c2_51 = arith.constant 2 : index
    %c0_52 = arith.constant 0 : index
    %c0_53 = arith.constant 0 : index
    %93 = vector.load %arg3[%c2_51, %c0_52, %c0_53] : memref<4x8x256xf32, #tpu.memory_space<vmem>>, vector<1x8x256xf32>
    %94 = vector.shape_cast %93 : vector<1x8x256xf32> to vector<8x256xf32>
    %95 = arith.mulf %76, %94 : vector<8x256xf32>
    %cst_54 = arith.constant dense<0.000000e+00> : vector<8xf32>
    %96 = vector.multi_reduction <add>, %95, %cst_54 [1] : vector<8x256xf32> to vector<8xf32>
    %97 = vector.shape_cast %96 : vector<8xf32> to vector<8x1xf32>
    %98 = vector.broadcast %97 : vector<8x1xf32> to vector<8x256xf32>
    %99 = arith.mulf %98, %94 : vector<8x256xf32>
    %100 = arith.subf %92, %99 : vector<8x256xf32>
    %101 = arith.mulf %100, %100 : vector<8x256xf32>
    %cst_55 = arith.constant dense<0.000000e+00> : vector<8xf32>
    %102 = vector.multi_reduction <add>, %101, %cst_55 [1] : vector<8x256xf32> to vector<8xf32>
    %103 = vector.shape_cast %102 : vector<8xf32> to vector<8x1xf32>
    %104 = math.rsqrt %103 : vector<8x1xf32>
    %105 = vector.broadcast %104 : vector<8x1xf32> to vector<8x256xf32>
    %106 = arith.mulf %100, %105 : vector<8x256xf32>
    %107 = arith.cmpf one, %106, %106 : vector<8x256xf32>
    %cst_56 = arith.constant 0.000000e+00 : f32
    %108 = vector.broadcast %cst_56 : f32 to vector<8x256xf32>
    %109 = arith.select %107, %108, %106 : vector<8x256xi1>, vector<8x256xf32>
    %c3_57 = arith.constant 3 : index
    %c0_58 = arith.constant 0 : index
    %c0_59 = arith.constant 0 : index
    %110 = vector.load %arg3[%c3_57, %c0_58, %c0_59] : memref<4x8x256xf32, #tpu.memory_space<vmem>>, vector<1x8x256xf32>
    %111 = vector.shape_cast %110 : vector<1x8x256xf32> to vector<8x256xf32>
    %112 = vector.shape_cast %109 : vector<8x256xf32> to vector<1x8x256xf32>
    tpu.vector_store %arg3[%c3_57, %c0_58, %c0_59], %112 {strides = array<i32>} : memref<4x8x256xf32, #tpu.memory_space<vmem>>, vector<1x8x256xf32>,
    %c3_60 = arith.constant 3 : index
    %c0_61 = arith.constant 0 : index
    %c0_62 = arith.constant 0 : index
    %113 = vector.load %arg2[%c3_60, %c0_61, %c0_62] : memref<4x8x256xf32, #tpu.memory_space<vmem>>, vector<1x8x256xf32>
    %114 = vector.shape_cast %113 : vector<1x8x256xf32> to vector<8x256xf32>
    %115 = vector.shape_cast %109 : vector<8x256xf32> to vector<1x8x256xf32>
    tpu.vector_store %arg2[%c3_60, %c0_61, %c0_62], %115 {strides = array<i32>} : memref<4x8x256xf32, #tpu.memory_space<vmem>>, vector<1x8x256xf32>,
    return
  }
  func.func @transform_0(%arg0: i32) -> (i32, i32, i32) {
    %c0_i32 = arith.constant 0 : i32
    %c0_i32_0 = arith.constant 0 : i32
    %c0_i32_1 = arith.constant 0 : i32
    return %c0_i32, %arg0, %c0_i32_0 : i32, i32, i32
  }
  func.func @transform_1(%arg0: i32) -> (i32, i32, i32) {
    %c0_i32 = arith.constant 0 : i32
    %c0_i32_0 = arith.constant 0 : i32
    %c0_i32_1 = arith.constant 0 : i32
    return %c0_i32, %arg0, %c0_i32_0 : i32, i32, i32
  }
}

</mosaic_0001>

<llo_original>
// kernel: tpu_custom_call.1
$region0: #{tpu_custom_call.1}
  #allocation0 [shape = 'u32[]', space=smem, size = 0x4, offset = 0x4, fixed_abs, tag = 'smem constant byte address 0x4 - core index']
  #allocation1 [shape = 'u32[72,128]{1,0:T(1,128)}', space=vmem, size = 0x9000, scoped, tag = 'internal scratch']
  #allocation2 [shape = 'f32[4,8,256]{2,1,0:T(8,128)}', space=vmem, size = 0x8000, scoped, tag = 'scratch operand']
  %s0 = inlined_call_operand.vmem [shape: f32[4,12,256], index: 0, kind: input, shape index: {}]
  %s1 = inlined_call_operand.vmem [shape: f32[4,12,256], index: 1, kind: output, shape index: {}]
  %s2 = sld [smem:[#allocation0]]
  $region79: #{tpu_custom_call.1} parent=0
    _
  %s4 = ssub.s32 1, %s2
  %s5 = scalar_select 0, %s4, %s2
  $region1: #{tpu_custom_call.1} parent=0
    #allocation3 [shape = 'u8[65536]{0}', space=vmem, size = 0x10000, scoped, tag = 'input window, operand 0']
    #allocation4 [shape = 'u8[65536]{0}', space=vmem, size = 0x10000, scoped, tag = 'output window, operand 0']
    loop: start=0, step=1, limit=4
    $region2: #{tpu_custom_call.1} parent=1 // loop_pre_header
      _
    $region3: #{tpu_custom_call.1} parent=1 // loop_header
      %s7 = sphi 0, %s11
      %p8 = scmp.ge.s32.totalorder %s7, 4
      %s17 = sphi 0, %s19
      %s20 = sphi 0, %s17
      %s21 = sphi 0, %s20
      %s37 = sphi 0, %s21
      %s43 = sphi 0, %s45
      %s46 = sphi 0, %s43
      %s47 = sphi 0, %s46
      %s63 = sphi 0, %s47
    $region4: #{tpu_custom_call.1} parent=1 // loop_header_branch
      %10 = sbr.rel (%p8) target = $region8
    $region5: #{tpu_custom_call.1} parent=1 // loop_body
      %s12 = ssub.s32 %s7, 1
      %s13 = ssub.s32 %s7, 2
      %s14 = sadd.s32 %s7, 1
      %s15 = ssub.s32 %s7, %s14
      %p16 = scmp.eq.s32.totalorder %s15, 0
      %s18 = sadd.s32 %s17, 1
      %s19 = scalar_select %p16, %s17, %s18
      %p22 = pneg %p16
      %p23 = scmp.eq.s32.totalorder %s7, 1
      %p24 = por %p22, %p23
      %p25 = scmp.ne.s32.totalorder %s17, %s20
      %p26 = scmp.eq.s32.totalorder %s7, 0
      %p27 = por %p25, %p26
      %p28 = scmp.ne.s32.totalorder %s17, %s20
      %p29 = scmp.eq.s32.totalorder %s12, 1
      %p30 = por %p28, %p29
      %p31 = scmp.ne.s32.totalorder %s20, %s21
      %p32 = scmp.eq.s32.totalorder %s12, 0
      %p33 = por %p31, %p32
      %p34 = scmp.ne.s32.totalorder %s20, %s21
      %p35 = scmp.eq.s32.totalorder %s13, 1
      %p36 = por %p34, %p35
      %p38 = scmp.ne.s32.totalorder %s21, %s37
      %p39 = scmp.eq.s32.totalorder %s13, 0
      %p40 = por %p38, %p39
      %s41 = ssub.s32 %s7, %s14
      %p42 = scmp.eq.s32.totalorder %s41, 0
      %s44 = sadd.s32 %s43, 1
      %s45 = scalar_select %p42, %s43, %s44
      %p48 = pneg %p42
      %p49 = scmp.eq.s32.totalorder %s7, 1
      %p50 = por %p48, %p49
      %p51 = scmp.ne.s32.totalorder %s43, %s46
      %p52 = scmp.eq.s32.totalorder %s7, 0
      %p53 = por %p51, %p52
      %p54 = scmp.ne.s32.totalorder %s43, %s46
      %p55 = scmp.eq.s32.totalorder %s12, 1
      %p56 = por %p54, %p55
      %p57 = scmp.ne.s32.totalorder %s46, %s47
      %p58 = scmp.eq.s32.totalorder %s12, 0
      %p59 = por %p57, %p58
      %p60 = scmp.ne.s32.totalorder %s46, %s47
      %p61 = scmp.eq.s32.totalorder %s13, 1
      %p62 = por %p60, %p61
      %p64 = scmp.ne.s32.totalorder %s47, %s63
      %p65 = scmp.eq.s32.totalorder %s13, 0
      %p66 = por %p64, %p65
      %p67 = scmp.le.s32.totalorder 1, %s7
      %p68 = scmp.lt.s32.totalorder %s7, 3
      %p69 = pnand %p67, %p68
      %p70 = pneg %p69
      // Predicated region
      $region9: #{tpu_custom_call.1} parent=5 // pred_check
        _
      $region10: #{tpu_custom_call.1} parent=5 // pred_check_branch
        %72 = sbr.rel (%p69) target = $region12
      $region11: #{tpu_custom_call.1} parent=5 // pred_region
        %s73 = ssub.s32 %s7, 1
      $region12: #{tpu_custom_call.1} parent=5 // pred_fallthru
        _
      %p74 = scmp.lt.s32.totalorder %s7, 2
      // Predicated region
      $region13: #{tpu_custom_call.1} parent=5 // pred_check
        %p75 = pneg %p74
      $region14: #{tpu_custom_call.1} parent=5 // pred_check_branch
        %77 = sbr.rel (%p75) target = $region16
      $region15: #{tpu_custom_call.1} parent=5 // pred_region
        // Predicated region
        $region17: #{tpu_custom_call.1} parent=15 // pred_check
          %p78 = pneg %p27
        $region18: #{tpu_custom_call.1} parent=15 // pred_check_branch
          %80 = sbr.rel (%p78) target = $region20
        $region19: #{tpu_custom_call.1} parent=15 // pred_region
          %s81 = sand.u32 %s17, 1
          %s82 = sand.u32 %s17, 1
          %s83 = smul.addr %s82, 64
          %s84 = scalar_lea.vmem [#allocation3], %s83
          %s85 = smul.addr %s7, 2
          %s86 = smul.addr %s85, 8
          %s87 = scalar_lea.vmem %s0, %s86
          // Predicated region
          $region21: #{tpu_custom_call.1} parent=19 // pred_check
            _
          $region22: #{tpu_custom_call.1} parent=19 // pred_check_branch
            %89 = sbr.rel (0) target = $region24
          $region23: #{tpu_custom_call.1} parent=19 // pred_region
            // Predicated region
            $region25: #{tpu_custom_call.1} parent=23 // pred_check
              _
            $region26: #{tpu_custom_call.1} parent=23 // pred_check_branch
              %91 = sbr.rel (0) target = $region28
            $region27: #{tpu_custom_call.1} parent=23 // pred_region
              loop: start=0, step=1, limit=1
              $region29: #{tpu_custom_call.1} parent=27 // loop_pre_header
                _
              $region30: #{tpu_custom_call.1} parent=27 // loop_header
                %s93 = sphi 0, %s97
                %p94 = scmp.ge.s32.totalorder %s93, 1
                %s98 = sphi %s87, %s87
                %s99 = sphi %s84, %s84
              $region31: #{tpu_custom_call.1} parent=27 // loop_header_branch
                %96 = sbr.rel (%p94) target = $region35
              $region32: #{tpu_custom_call.1} parent=27 // loop_body
                %v100 = vld [vmem:[%s98] sm:$0xff]
                %101 = vst [vmem:[%s99] sm:$0xff] %v100
                %v102 = vld [vmem:[%s98 + $0x8] sm:$0xff]
                %103 = vst [vmem:[%s99 + $0x8] sm:$0xff] %v102
                %v104 = vld [vmem:[%s98 + $0x20] sm:$0xff]
                %105 = vst [vmem:[%s99 + $0x10] sm:$0xff] %v104
                %v106 = vld [vmem:[%s98 + $0x28] sm:$0xff]
                %107 = vst [vmem:[%s99 + $0x18] sm:$0xff] %v106
                %v108 = vld [vmem:[%s98 + $0x40] sm:$0xff]
                %109 = vst [vmem:[%s99 + $0x20] sm:$0xff] %v108
                %v110 = vld [vmem:[%s98 + $0x48] sm:$0xff]
                %111 = vst [vmem:[%s99 + $0x28] sm:$0xff] %v110
                %v112 = vld [vmem:[%s98 + $0x60] sm:$0xff]
                %113 = vst [vmem:[%s99 + $0x30] sm:$0xff] %v112
                %v114 = vld [vmem:[%s98 + $0x68] sm:$0xff]
                %115 = vst [vmem:[%s99 + $0x38] sm:$0xff] %v114
              $region33: #{tpu_custom_call.1} parent=27 // loop_footer
                %s97 = sadd.s32 1, %s93
              $region34: #{tpu_custom_call.1} parent=27 // loop_footer_branch
                %92 = sbr.rel target = $region30
              $region35: #{tpu_custom_call.1} parent=27 // loop_exit
                _
            $region28: #{tpu_custom_call.1} parent=23 // pred_fallthru
              _
            // Predicated region
            $region36: #{tpu_custom_call.1} parent=23 // pred_check
              _
            $region37: #{tpu_custom_call.1} parent=23 // pred_check_branch
              %117 = sbr.rel target = $region39
            $region38: #{tpu_custom_call.1} parent=23 // pred_region
              _
            $region39: #{tpu_custom_call.1} parent=23 // pred_fallthru
              _
          $region24: #{tpu_custom_call.1} parent=19 // pred_fallthru
            _
          %118 = vnop
        $region20: #{tpu_custom_call.1} parent=15 // pred_fallthru
          _
      $region16: #{tpu_custom_call.1} parent=5 // pred_fallthru
        _
      %p119 = scmp.le.s32.totalorder 1, %s7
      %p120 = scmp.lt.s32.totalorder %s7, 3
      %p121 = pnand %p119, %p120
      %p122 = pneg %p121
      // Predicated region
      $region40: #{tpu_custom_call.1} parent=5 // pred_check
        _
      $region41: #{tpu_custom_call.1} parent=5 // pred_check_branch
        %124 = sbr.rel (%p121) target = $region43
      $region42: #{tpu_custom_call.1} parent=5 // pred_region
        %s125 = ssub.s32 %s7, 1
        %s126 = sand.u32 %s20, 1
        %s127 = sand.u32 %s20, 1
        %s128 = smul.addr %s127, 64
        %s129 = scalar_lea.vmem [#allocation3], %s128
        // Predicated region
        $region44: #{tpu_custom_call.1} parent=42 // pred_check
          %p130 = pneg %p33
        $region45: #{tpu_custom_call.1} parent=42 // pred_check_branch
          %132 = sbr.rel (%p130) target = $region47
        $region46: #{tpu_custom_call.1} parent=42 // pred_region
          _
        $region47: #{tpu_custom_call.1} parent=42 // pred_fallthru
          _
        %s133 = sand.u32 %s20, 1
        %s134 = sand.u32 %s20, 1
        %s135 = smul.addr %s134, 64
        %s136 = scalar_lea.vmem [#allocation3], %s135
        %p137 = pneg %p33
        %p138 = pneg %p30
        %p139 = pneg %p59
        %p140 = pneg %p56
        %s141 = sand.u32 %s46, 1
        %s142 = sand.u32 %s46, 1
        %s143 = smul.addr %s142, 64
        %s144 = scalar_lea.vmem [#allocation4], %s143
        %v145 = vld [vmem:[%s129] sm:$0xff]
        %v146 = vld [vmem:[%s129 + $0x8] sm:$0xff]
        %v147 = vmul.f32 %v145, %v145
        %v148 = vmul.f32 %v146, %v146
        %v149 = vadd.f32 %v147, %v148
        %150 = vadd.xlane.f32.xlu0 %v149
        %v151 = vpop.xlane.xlu0 %150
        %v152 = vrsqrt.pop %v151
        %v153 = vmul.f32 %v152, %v151
        %v154 = vmul.f32 %v153, %v152
        %v155 = vmul.f32 0.5, %v154
        %v156 = vsub.f32 1.5, %v155
        %v157 = vmul.f32 %v152, %v156
        %vm158 = vweird.f32 %v151
        %vm159 = vweird.f32 %v152
        %vm160 = vmor %vm158, %vm159
        %v161 = vsel %vm160, %v152, %v157
        %v162 = vmul.f32 %v145, %v161
        %v163 = vmul.f32 %v146, %v161
        %vm164 = vcmp.ne.f32.partialorder %v162, %v162
        %vm165 = vcmp.ne.f32.partialorder %v163, %v163
        %v166 = vsel %vm164, 0.0, %v162
        %v167 = vsel %vm165, 0.0, %v163
        %168 = vst [vmem:[#allocation2] sm:$0xff] %v166
        %169 = vst [vmem:[#allocation2 + $0x8] sm:$0xff] %v167
        %170 = vst [vmem:[%s144] sm:$0xff] %v166
        %171 = vst [vmem:[%s144 + $0x8] sm:$0xff] %v167
        %s172 = scalar_lea.vmem %s129, 16 [#allocation3]
        %v173 = vld [vmem:[%s172] sm:$0xff]
        %v174 = vld [vmem:[%s172 + $0x8] sm:$0xff]
        %v175 = vld [vmem:[#allocation2] sm:$0xff]
        %v176 = vld [vmem:[#allocation2 + $0x8] sm:$0xff]
        %v177 = vmul.f32 %v173, %v175
        %v178 = vmul.f32 %v174, %v176
        %v179 = vadd.f32 %v177, %v178
        %180 = vadd.xlane.f32.xlu0 %v179
        %v181 = vpop.xlane.xlu0 %180
        %v182 = vmul.f32 %v181, %v175
        %v183 = vmul.f32 %v181, %v176
        %v184 = vsub.f32 %v173, %v182
        %v185 = vsub.f32 %v174, %v183
        %v186 = vmul.f32 %v184, %v184
        %v187 = vmul.f32 %v185, %v185
        %v188 = vadd.f32 %v186, %v187
        %189 = vadd.xlane.f32.xlu0 %v188
        %v190 = vpop.xlane.xlu0 %189
        %v191 = vrsqrt.pop %v190
        %v192 = vmul.f32 %v191, %v190
        %v193 = vmul.f32 %v192, %v191
        %v194 = vmul.f32 0.5, %v193
        %v195 = vsub.f32 1.5, %v194
        %v196 = vmul.f32 %v191, %v195
        %vm197 = vweird.f32 %v190
        %vm198 = vweird.f32 %v191
        %vm199 = vmor %vm197, %vm198
        %v200 = vsel %vm199, %v191, %v196
        %v201 = vmul.f32 %v184, %v200
        %v202 = vmul.f32 %v185, %v200
        %vm203 = vcmp.ne.f32.partialorder %v201, %v201
        %vm204 = vcmp.ne.f32.partialorder %v202, %v202
        %v205 = vsel %vm203, 0.0, %v201
        %v206 = vsel %vm204, 0.0, %v202
        %s207 = scalar_lea.vmem [#allocation2], 16
        %208 = vst [vmem:[%s207] sm:$0xff] %v205
        %209 = vst [vmem:[%s207 + $0x8] sm:$0xff] %v206
        %s210 = scalar_lea.vmem %s144, 16 [#allocation4]
        %211 = vst [vmem:[%s210] sm:$0xff] %v205
        %212 = vst [vmem:[%s210 + $0x8] sm:$0xff] %v206
        %s213 = scalar_lea.vmem %s129, 32 [#allocation3]
        %v214 = vld [vmem:[%s213] sm:$0xff]
        %v215 = vld [vmem:[%s213 + $0x8] sm:$0xff]
        %v216 = vld [vmem:[#allocation2] sm:$0xff]
        %v217 = vld [vmem:[#allocation2 + $0x8] sm:$0xff]
        %v218 = vmul.f32 %v214, %v216
        %v219 = vmul.f32 %v215, %v217
        %v220 = vadd.f32 %v218, %v219
        %221 = vadd.xlane.f32.xlu0 %v220
        %v222 = vpop.xlane.xlu0 %221
        %v223 = vmul.f32 %v222, %v216
        %v224 = vmul.f32 %v222, %v217
        %v225 = vsub.f32 %v214, %v223
        %v226 = vsub.f32 %v215, %v224
        %v227 = vld [vmem:[%s207] sm:$0xff]
        %v228 = vld [vmem:[%s207 + $0x8] sm:$0xff]
        %v229 = vmul.f32 %v214, %v227
        %v230 = vmul.f32 %v215, %v228
        %v231 = vadd.f32 %v229, %v230
        %232 = vadd.xlane.f32.xlu0 %v231
        %v233 = vpop.xlane.xlu0 %232
        %v234 = vmul.f32 %v233, %v227
        %v235 = vmul.f32 %v233, %v228
        %v236 = vsub.f32 %v225, %v234
        %v237 = vsub.f32 %v226, %v235
        %v238 = vmul.f32 %v236, %v236
        %v239 = vmul.f32 %v237, %v237
        %v240 = vadd.f32 %v238, %v239
        %241 = vadd.xlane.f32.xlu0 %v240
        %v242 = vpop.xlane.xlu0 %241
        %v243 = vrsqrt.pop %v242
        %v244 = vmul.f32 %v243, %v242
        %v245 = vmul.f32 %v244, %v243
        %v246 = vmul.f32 0.5, %v245
        %v247 = vsub.f32 1.5, %v246
        %v248 = vmul.f32 %v243, %v247
        %vm249 = vweird.f32 %v242
        %vm250 = vweird.f32 %v243
        %vm251 = vmor %vm249, %vm250
        %v252 = vsel %vm251, %v243, %v248
        %v253 = vmul.f32 %v236, %v252
        %v254 = vmul.f32 %v237, %v252
        %vm255 = vcmp.ne.f32.partialorder %v253, %v253
        %vm256 = vcmp.ne.f32.partialorder %v254, %v254
        %v257 = vsel %vm255, 0.0, %v253
        %v258 = vsel %vm256, 0.0, %v254
        %s259 = scalar_lea.vmem [#allocation2], 32
        %260 = vst [vmem:[%s259] sm:$0xff] %v257
        %261 = vst [vmem:[%s259 + $0x8] sm:$0xff] %v258
        %s262 = scalar_lea.vmem %s144, 32 [#allocation4]
        %263 = vst [vmem:[%s262] sm:$0xff] %v257
        %264 = vst [vmem:[%s262 + $0x8] sm:$0xff] %v258
        %s265 = scalar_lea.vmem %s129, 48 [#allocation3]
        %v266 = vld [vmem:[%s265] sm:$0xff]
        %v267 = vld [vmem:[%s265 + $0x8] sm:$0xff]
        %v268 = vld [vmem:[#allocation2] sm:$0xff]
        %v269 = vld [vmem:[#allocation2 + $0x8] sm:$0xff]
        %v270 = vmul.f32 %v266, %v268
        %v271 = vmul.f32 %v267, %v269
        %v272 = vadd.f32 %v270, %v271
        %273 = vadd.xlane.f32.xlu0 %v272
        %v274 = vpop.xlane.xlu0 %273
        %v275 = vmul.f32 %v274, %v268
        %v276 = vmul.f32 %v274, %v269
        %v277 = vsub.f32 %v266, %v275
        %v278 = vsub.f32 %v267, %v276
        %v279 = vld [vmem:[%s207] sm:$0xff]
        %v280 = vld [vmem:[%s207 + $0x8] sm:$0xff]
        %v281 = vmul.f32 %v266, %v279
        %v282 = vmul.f32 %v267, %v280
        %v283 = vadd.f32 %v281, %v282
        %284 = vadd.xlane.f32.xlu0 %v283
        %v285 = vpop.xlane.xlu0 %284
        %v286 = vmul.f32 %v285, %v279
        %v287 = vmul.f32 %v285, %v280
        %v288 = vsub.f32 %v277, %v286
        %v289 = vsub.f32 %v278, %v287
        %v290 = vld [vmem:[%s259] sm:$0xff]
        %v291 = vld [vmem:[%s259 + $0x8] sm:$0xff]
        %v292 = vmul.f32 %v266, %v290
        %v293 = vmul.f32 %v267, %v291
        %v294 = vadd.f32 %v292, %v293
        %295 = vadd.xlane.f32.xlu0 %v294
        %v296 = vpop.xlane.xlu0 %295
        %v297 = vmul.f32 %v296, %v290
        %v298 = vmul.f32 %v296, %v291
        %v299 = vsub.f32 %v288, %v297
        %v300 = vsub.f32 %v289, %v298
        %v301 = vmul.f32 %v299, %v299
        %v302 = vmul.f32 %v300, %v300
        %v303 = vadd.f32 %v301, %v302
        %304 = vadd.xlane.f32.xlu0 %v303
        %v305 = vpop.xlane.xlu0 %304
        %v306 = vrsqrt.pop %v305
        %v307 = vmul.f32 %v306, %v305
        %v308 = vmul.f32 %v307, %v306
        %v309 = vmul.f32 0.5, %v308
        %v310 = vsub.f32 1.5, %v309
        %v311 = vmul.f32 %v306, %v310
        %vm312 = vweird.f32 %v305
        %vm313 = vweird.f32 %v306
        %vm314 = vmor %vm312, %vm313
        %v315 = vsel %vm314, %v306, %v311
        %v316 = vmul.f32 %v299, %v315
        %v317 = vmul.f32 %v300, %v315
        %vm318 = vcmp.ne.f32.partialorder %v316, %v316
        %vm319 = vcmp.ne.f32.partialorder %v317, %v317
        %v320 = vsel %vm318, 0.0, %v316
        %v321 = vsel %vm319, 0.0, %v317
        %s322 = scalar_lea.vmem [#allocation2], 48
        %323 = vst [vmem:[%s322] sm:$0xff] %v320
        %324 = vst [vmem:[%s322 + $0x8] sm:$0xff] %v321
        %s325 = scalar_lea.vmem %s144, 48 [#allocation4]
        %326 = vst [vmem:[%s325] sm:$0xff] %v320
        %327 = vst [vmem:[%s325 + $0x8] sm:$0xff] %v321
        %s328 = sand.u32 %s46, 1
        %s329 = sand.u32 %s46, 1
        %s330 = smul.addr %s329, 64
        %s331 = scalar_lea.vmem [#allocation4], %s330
        // Predicated region
        $region48: #{tpu_custom_call.1} parent=42 // pred_check
          %p332 = pneg %p56
        $region49: #{tpu_custom_call.1} parent=42 // pred_check_branch
          %334 = sbr.rel (%p332) target = $region51
        $region50: #{tpu_custom_call.1} parent=42 // pred_region
          %s335 = smul.addr %s12, 2
          %s336 = smul.addr %s335, 8
          %s337 = scalar_lea.vmem %s1, %s336
          // Predicated region
          $region52: #{tpu_custom_call.1} parent=50 // pred_check
            _
          $region53: #{tpu_custom_call.1} parent=50 // pred_check_branch
            %339 = sbr.rel (0) target = $region55
          $region54: #{tpu_custom_call.1} parent=50 // pred_region
            // Predicated region
            $region56: #{tpu_custom_call.1} parent=54 // pred_check
              _
            $region57: #{tpu_custom_call.1} parent=54 // pred_check_branch
              %341 = sbr.rel (0) target = $region59
            $region58: #{tpu_custom_call.1} parent=54 // pred_region
              loop: start=0, step=1, limit=1
              $region60: #{tpu_custom_call.1} parent=58 // loop_pre_header
                _
              $region61: #{tpu_custom_call.1} parent=58 // loop_header
                %s343 = sphi 0, %s347
                %p344 = scmp.ge.s32.totalorder %s343, 1
                %s348 = sphi %s331, %s331
                %s349 = sphi %s337, %s337
              $region62: #{tpu_custom_call.1} parent=58 // loop_header_branch
                %346 = sbr.rel (%p344) target = $region66
              $region63: #{tpu_custom_call.1} parent=58 // loop_body
                %v350 = vld [vmem:[%s348] sm:$0xff]
                %351 = vst [vmem:[%s349] sm:$0xff] %v350
                %v352 = vld [vmem:[%s348 + $0x8] sm:$0xff]
                %353 = vst [vmem:[%s349 + $0x8] sm:$0xff] %v352
                %v354 = vld [vmem:[%s348 + $0x10] sm:$0xff]
                %355 = vst [vmem:[%s349 + $0x20] sm:$0xff] %v354
                %v356 = vld [vmem:[%s348 + $0x18] sm:$0xff]
                %357 = vst [vmem:[%s349 + $0x28] sm:$0xff] %v356
                %v358 = vld [vmem:[%s348 + $0x20] sm:$0xff]
                %359 = vst [vmem:[%s349 + $0x40] sm:$0xff] %v358
                %v360 = vld [vmem:[%s348 + $0x28] sm:$0xff]
                %361 = vst [vmem:[%s349 + $0x48] sm:$0xff] %v360
                %v362 = vld [vmem:[%s348 + $0x30] sm:$0xff]
                %363 = vst [vmem:[%s349 + $0x60] sm:$0xff] %v362
                %v364 = vld [vmem:[%s348 + $0x38] sm:$0xff]
                %365 = vst [vmem:[%s349 + $0x68] sm:$0xff] %v364
              $region64: #{tpu_custom_call.1} parent=58 // loop_footer
                %s347 = sadd.s32 1, %s343
              $region65: #{tpu_custom_call.1} parent=58 // loop_footer_branch
                %342 = sbr.rel target = $region61
              $region66: #{tpu_custom_call.1} parent=58 // loop_exit
                _
            $region59: #{tpu_custom_call.1} parent=54 // pred_fallthru
              _
            // Predicated region
            $region67: #{tpu_custom_call.1} parent=54 // pred_check
              _
            $region68: #{tpu_custom_call.1} parent=54 // pred_check_branch
              %367 = sbr.rel target = $region70
            $region69: #{tpu_custom_call.1} parent=54 // pred_region
              _
            $region70: #{tpu_custom_call.1} parent=54 // pred_fallthru
              _
          $region55: #{tpu_custom_call.1} parent=50 // pred_fallthru
            _
          %368 = vnop
        $region51: #{tpu_custom_call.1} parent=42 // pred_fallthru
          _
      $region43: #{tpu_custom_call.1} parent=5 // pred_fallthru
        _
      %p369 = scmp.le.s32.totalorder 2, %s7
      // Predicated region
      $region71: #{tpu_custom_call.1} parent=5 // pred_check
        %p370 = pneg %p369
      $region72: #{tpu_custom_call.1} parent=5 // pred_check_branch
        %372 = sbr.rel (%p370) target = $region74
      $region73: #{tpu_custom_call.1} parent=5 // pred_region
        %s373 = ssub.s32 %s7, 2
        // Predicated region
        $region75: #{tpu_custom_call.1} parent=73 // pred_check
          %p374 = pneg %p62
        $region76: #{tpu_custom_call.1} parent=73 // pred_check_branch
          %376 = sbr.rel (%p374) target = $region78
        $region77: #{tpu_custom_call.1} parent=73 // pred_region
          %s377 = sand.u32 %s47, 1
          %s378 = sand.u32 %s47, 1
          %s379 = smul.addr %s378, 64
          %s380 = scalar_lea.vmem [#allocation4], %s379
        $region78: #{tpu_custom_call.1} parent=73 // pred_fallthru
          _
      $region74: #{tpu_custom_call.1} parent=5 // pred_fallthru
        _
    $region6: #{tpu_custom_call.1} parent=1 // loop_footer
      %s11 = sadd.s32 1, %s7
    $region7: #{tpu_custom_call.1} parent=1 // loop_footer_branch
      %6 = sbr.rel target = $region3
    $region8: #{tpu_custom_call.1} parent=1 // loop_exit
      _

</llo_original>
